<compile_context>
chip_gen: v5e
topology: v5e:2x2
jax: 0.10.0
libtpu: 0.0.40
codegen_flags: <defaults>
</compile_context>

<pallas_src>
import functools

import jax
import jax.numpy as jnp
from jax.experimental import pallas as pl
from jax.experimental.pallas import tpu as pltpu

_TARGET_BLOCK_ELEMS = 512 * 1024   # ~2 MiB of f32 per input block


def _num_core_splits():
    """2 partial sums on v7x (2 TensorCores/chip), 1 on v5e/v6e."""
    try:
        kind = jax.devices()[0].device_kind.lower()
    except Exception:
        return 1
    return 2 if "v7" in kind else 1


def _edge_aware_loss_kernel(pred_ref, target_ref, out_ref, acc_ref, *,
                            edge_weight, inv_count, n_valid, tb, bpc,
                            need_mask, h_eff, w_lane, w, pack):
    b = pl.program_id(1)

    @pl.when(b == 0)
    def _():
        acc_ref[...] = jnp.zeros_like(acc_ref)

    x = pred_ref[...].astype(jnp.float32)    # (tb, h_eff, w_lane) logits
    t = target_ref[...].astype(jnp.float32)  # (tb, h_eff, w_lane) targets

    # ---- boundary masks: built once, reused by every shift of both images ----
    row = jax.lax.broadcasted_iota(jnp.int32, (1, h_eff, 1), 1)
    lane = jax.lax.broadcasted_iota(jnp.int32, (1, 1, w_lane), 2)
    r_first = row == 0
    r_last = row == (h_eff - 1)
    if pack > 1:
        col_local = lane % w                # column inside the packed sub-image
        seg_first = lane < w                # lanes holding sub-image row s == 0
        seg_last = lane >= (pack - 1) * w   # lanes holding sub-image row s == pack-1
    else:
        col_local = lane
    c_first = col_local == 0
    c_last = col_local == (w - 1)

    # ---- zero-padded shifts (match conv2d padding=1) -------------------------
    if pack == 1:
        def up(a):       # original-image row i-1
            r = pltpu.roll(a, shift=1, axis=1)
            return jnp.where(r_first, 0.0, r)

        def down(a):     # original-image row i+1
            r = pltpu.roll(a, shift=h_eff - 1, axis=1)
            return jnp.where(r_last, 0.0, r)
    else:
        def up(a):       # original-image row i-1 in lane-packed layout
            lr = pltpu.roll(a, shift=w, axis=2)
            wrap = pltpu.roll(lr, shift=1, axis=1)
            wrap = jnp.where(r_first, 0.0, wrap)
            return jnp.where(seg_first, wrap, lr)

        def down(a):     # original-image row i+1 in lane-packed layout
            lr = pltpu.roll(a, shift=w_lane - w, axis=2)
            wrap = pltpu.roll(lr, shift=h_eff - 1, axis=1)
            wrap = jnp.where(r_last, 0.0, wrap)
            return jnp.where(seg_last, wrap, lr)

    def left(a):         # original-image column j-1
        r = pltpu.roll(a, shift=1, axis=2)
        return jnp.where(c_first, 0.0, r)

    def right(a):        # original-image column j+1
        r = pltpu.roll(a, shift=w_lane - 1, axis=2)
        return jnp.where(c_last, 0.0, r)

    def sobel(img):
        xm1 = up(img)
        xp1 = down(img)
        v_smooth = xm1 + 2.0 * img + xp1     # vertical [1, 2, 1]
        v_diff = xp1 - xm1                   # vertical [-1, 0, 1]
        gx = right(v_smooth) - left(v_smooth)
        gy = left(v_diff) + 2.0 * v_diff + right(v_diff)
        return jnp.sqrt(gx * gx + gy * gy)

    p = jax.nn.sigmoid(x)

    edge_sq = (sobel(p) - sobel(t)) ** 2

    # PyTorch F.binary_cross_entropy: log terms clamped at -100.
    log_p = jnp.maximum(jnp.log(p), -100.0)
    log_1mp = jnp.maximum(jnp.log(1.0 - p), -100.0)
    bce = -(t * log_p + (1.0 - t) * log_1mp)

    e = bce + edge_weight * edge_sq          # combined per-element contribution

    if need_mask:
        raw_blk = pl.program_id(0) * bpc + b
        img_idx = raw_blk * tb + jax.lax.broadcasted_iota(
            jnp.int32, (tb, 1, 1), 0)
        e = jnp.where(img_idx < n_valid, e, 0.0)

    # Per-step partial reduction over leading axes only (plain VPU adds) when
    # the layout allows; the cross-lane/sublane reduce to a scalar is paid once
    # in the epilogue.
    if h_eff % 8 == 0:
        acc_ref[...] += jnp.sum(e.reshape(tb, h_eff // 8, 8, w_lane),
                                axis=(0, 1))
    elif h_eff <= 8:
        acc_ref[0:h_eff, :] = acc_ref[0:h_eff, :] + jnp.sum(e, axis=0)
    else:
        acc_ref[0:1, :] = acc_ref[0:1, :] + jnp.sum(e, axis=(0, 1))[None, :]

    @pl.when(b == pl.num_programs(1) - 1)
    def _():
        total = jnp.sum(acc_ref[...], keepdims=True)     # (1, 1)
        out_ref[...] = (total * inv_count).reshape(1, 1, 1)


def edge_aware_loss(pred, target, edge_weight=2.0):
    """pred, target: (N, 1, H, W). Returns scalar loss (matches EdgeAwareLoss)."""
    assert pred.shape == target.shape
    n, c, h, w = pred.shape
    assert c == 1, "the Sobel conv in the reference module is single-channel"

    p = pred.reshape(n, h, w)
    t = target.reshape(n, h, w)

    # Lane packing: for narrow images, a FREE contiguous reshape packs
    # pack = 128 // W consecutive image rows into one lane-dense 128-wide row.
    if w < 128 and 128 % w == 0 and h % (128 // w) == 0:
        pack = 128 // w
    else:
        pack = 1
    h_eff = h // pack
    w_lane = w * pack
    if pack > 1:
        p = p.reshape(n, h_eff, w_lane)
        t = t.reshape(n, h_eff, w_lane)

    # Images per block: ~2 MiB of f32 per input block.
    tb = int(max(1, min(n, _TARGET_BLOCK_ELEMS // max(1, h * w))))
    nb = -(-n // tb)                              # number of image blocks
    cores = max(1, min(_num_core_splits(), nb))   # 2 only on v7x
    bpc = -(-nb // cores)                         # blocks per core
    need_mask = (n % tb != 0) or (cores * bpc != nb)

    def in_map(ci, bi):
        # Clamp keeps the DMA in-bounds when a core has fewer real blocks;
        # duplicated / partial blocks are zeroed by the in-kernel mask.
        return (jnp.minimum(ci * bpc + bi, nb - 1), 0, 0)

    kernel = functools.partial(
        _edge_aware_loss_kernel,
        edge_weight=float(edge_weight),
        inv_count=1.0 / float(n * h * w),
        n_valid=n, tb=tb, bpc=bpc, need_mask=need_mask,
        h_eff=h_eff, w_lane=w_lane, w=w, pack=pack)

    blk_bytes = tb * h * w * 4
    vmem_limit = int(min(120 * 1024 * 1024,
                         max(32 * 1024 * 1024, 4 * blk_bytes + 8 * 1024 * 1024)))

    partials = pl.pallas_call(
        kernel,
        out_shape=jax.ShapeDtypeStruct((cores, 1, 1), jnp.float32),
        grid_spec=pltpu.PrefetchScalarGridSpec(
            num_scalar_prefetch=0,
            grid=(cores, bpc),
            in_specs=[pl.BlockSpec((tb, h_eff, w_lane), in_map),
                      pl.BlockSpec((tb, h_eff, w_lane), in_map)],
            out_specs=pl.BlockSpec((1, 1, 1), lambda ci, bi: (ci, 0, 0)),
            scratch_shapes=[pltpu.VMEM((8, w_lane), jnp.float32)],
        ),
        compiler_params=pltpu.CompilerParams(
            dimension_semantics=("parallel", "arbitrary"),
            vmem_limit_bytes=vmem_limit),
    )(p, t)
    return jnp.sum(partials)


def _reference_loss(pred, target, edge_weight=2.0):
    """Plain-JAX reference mirroring the PyTorch module."""
    kx = jnp.array([[-1, 0, 1], [-2, 0, 2], [-1, 0, 1]], jnp.float32)[None, None]
    ky = jnp.array([[-1, -2, -1], [0, 0, 0], [1, 2, 1]], jnp.float32)[None, None]

    def edges(x):
        dn = ('NCHW', 'OIHW', 'NCHW')
        gx = jax.lax.conv_general_dilated(x, kx, (1, 1), 'SAME',
                                          dimension_numbers=dn)
        gy = jax.lax.conv_general_dilated(x, ky, (1, 1), 'SAME',
                                          dimension_numbers=dn)
        return jnp.sqrt(gx ** 2 + gy ** 2)

    p = jax.nn.sigmoid(pred.astype(jnp.float32))
    t = target.astype(jnp.float32)
    edge_loss = jnp.mean((edges(p) - edges(t)) ** 2)
    log_p = jnp.maximum(jnp.log(p), -100.0)
    log_1mp = jnp.maximum(jnp.log(1.0 - p), -100.0)
    bce = jnp.mean(-(t * log_p + (1.0 - t) * log_1mp))
    return bce + edge_weight * edge_loss


if __name__ == "__main__":
    key = jax.random.PRNGKey(0)
    k1, k2 = jax.random.split(key)
    N, C, H, W = 2, 1, 16, 16   # module's Sobel conv requires a single channel
    pred = jax.random.normal(k1, (N, C, H, W), dtype=jnp.float32)
    target = jax.random.uniform(k2, (N, C, H, W), dtype=jnp.float32)

    loss = jax.block_until_ready(edge_aware_loss(pred, target, edge_weight=2.0))
    ref = jax.block_until_ready(_reference_loss(pred, target, edge_weight=2.0))

    assert jnp.isfinite(loss), "loss is not finite"
    assert jnp.allclose(loss, ref, rtol=1e-4, atol=1e-5), (loss, ref)
    print("KERNEL_OK")
</pallas_src>

<mosaic_0001>
module attributes {stable_mosaic.version = 11 : i64} {
  func.func @_edge_aware_loss_kernel(%arg0: i32, %arg1: i32, %arg2: memref<2x2x128xf32, #tpu.memory_space<vmem>>, %arg3: memref<2x2x128xf32, #tpu.memory_space<vmem>>, %arg4: memref<1x1x1xf32, #tpu.memory_space<vmem>>, %arg5: memref<8x128xf32, #tpu.memory_space<vmem>>) attributes {dimension_semantics = [#tpu.dimension_semantics<parallel>, #tpu.dimension_semantics<arbitrary>], iteration_bounds = array<i64: 1, 1>, scalar_prefetch = 0 : i64, scratch_operands = 1 : i64, tpu.core_type = #tpu.core_type<tc>, window_params = [{transform_indices = @transform_0, window_bounds = array<i64: 2, 2, 128>}, {transform_indices = @transform_1, window_bounds = array<i64: 2, 2, 128>}, {transform_indices = @transform_2, window_bounds = array<i64: 1, 1, 1>}]} {
    %c0_i32 = arith.constant 0 : i32
    %0 = arith.cmpi eq, %arg1, %c0_i32 : i32
    %1 = arith.extui %0 : i1 to i32
    %c0_i32_0 = arith.constant 0 : i32
    %2 = arith.cmpi ne, %1, %c0_i32_0 : i32
    scf.if %2 {
      %cst_58 = arith.constant 0.000000e+00 : f32
      %171 = vector.broadcast %cst_58 : f32 to vector<8x128xf32>
      %c0_59 = arith.constant 0 : index
      %c0_60 = arith.constant 0 : index
      %172 = vector.load %arg5[%c0_59, %c0_60] : memref<8x128xf32, #tpu.memory_space<vmem>>, vector<8x128xf32>
      tpu.vector_store %arg5[%c0_59, %c0_60], %171 {strides = array<i32>} : memref<8x128xf32, #tpu.memory_space<vmem>>, vector<8x128xf32>,
    } else {
    }
    %c0 = arith.constant 0 : index
    %c0_1 = arith.constant 0 : index
    %c0_2 = arith.constant 0 : index
    %3 = vector.load %arg2[%c0, %c0_1, %c0_2] : memref<2x2x128xf32, #tpu.memory_space<vmem>>, vector<2x2x128xf32>
    %c0_3 = arith.constant 0 : index
    %c0_4 = arith.constant 0 : index
    %c0_5 = arith.constant 0 : index
    %4 = vector.load %arg3[%c0_3, %c0_4, %c0_5] : memref<2x2x128xf32, #tpu.memory_space<vmem>>, vector<2x2x128xf32>
    %5 = tpu.iota {dimensions = array<i32: 1>} : vector<1x2x1xi32>
    %6 = tpu.iota {dimensions = array<i32: 2>} : vector<1x1x128xi32>
    %c0_i32_6 = arith.constant 0 : i32
    %7 = vector.broadcast %c0_i32_6 : i32 to vector<1x2x1xi32>
    %8 = arith.cmpi eq, %5, %7 : vector<1x2x1xi32>
    %c1_i32 = arith.constant 1 : i32
    %9 = vector.broadcast %c1_i32 : i32 to vector<1x2x1xi32>
    %10 = arith.cmpi eq, %5, %9 : vector<1x2x1xi32>
    %c16_i32 = arith.constant 16 : i32
    %c0_i32_7 = arith.constant 0 : i32
    %11 = arith.cmpi eq, %c16_i32, %c0_i32_7 : i32
    %c1_i32_8 = arith.constant 1 : i32
    %12 = arith.select %11, %c1_i32_8, %c16_i32 : i32
    %13 = vector.broadcast %12 : i32 to vector<1x1x128xi32>
    %14 = arith.remsi %6, %13 : vector<1x1x128xi32>
    %c0_i32_9 = arith.constant 0 : i32
    %15 = vector.broadcast %c0_i32_9 : i32 to vector<1x1x128xi32>
    %16 = arith.cmpi ne, %14, %15 : vector<1x1x128xi32>
    %c0_i32_10 = arith.constant 0 : i32
    %17 = vector.broadcast %c0_i32_10 : i32 to vector<1x1x128xi32>
    %18 = arith.cmpi slt, %14, %17 : vector<1x1x128xi32>
    %c0_i32_11 = arith.constant 0 : i32
    %19 = arith.cmpi slt, %12, %c0_i32_11 : i32
    %20 = vector.broadcast %19 : i1 to vector<1x1x128xi1>
    %21 = vector.broadcast %20 : vector<1x1x128xi1> to vector<1x1x128xi1>
    %22 = arith.xori %18, %21 : vector<1x1x128xi1>
    %23 = arith.andi %22, %16 : vector<1x1x128xi1>
    %24 = vector.broadcast %12 : i32 to vector<1x1x128xi32>
    %25 = arith.addi %14, %24 : vector<1x1x128xi32>
    %26 = arith.select %23, %25, %14 : vector<1x1x128xi1>, vector<1x1x128xi32>
    %c16_i32_12 = arith.constant 16 : i32
    %27 = vector.broadcast %c16_i32_12 : i32 to vector<1x1x128xi32>
    %28 = arith.cmpi slt, %6, %27 : vector<1x1x128xi32>
    %c112_i32 = arith.constant 112 : i32
    %29 = vector.broadcast %c112_i32 : i32 to vector<1x1x128xi32>
    %30 = arith.cmpi sge, %6, %29 : vector<1x1x128xi32>
    %c0_i32_13 = arith.constant 0 : i32
    %31 = vector.broadcast %c0_i32_13 : i32 to vector<1x1x128xi32>
    %32 = arith.cmpi eq, %26, %31 : vector<1x1x128xi32>
    %c15_i32 = arith.constant 15 : i32
    %33 = vector.broadcast %c15_i32 : i32 to vector<1x1x128xi32>
    %34 = arith.cmpi eq, %26, %33 : vector<1x1x128xi32>
    %35 = arith.negf %3 : vector<2x2x128xf32>
    %36 = math.exp %35 : vector<2x2x128xf32>
    %cst = arith.constant 1.000000e+00 : f32
    %37 = vector.broadcast %cst : f32 to vector<2x2x128xf32>
    %38 = arith.addf %37, %36 : vector<2x2x128xf32>
    %39 = arith.divf %37, %38 : vector<2x2x128xf32>
    %c16_i32_14 = arith.constant 16 : i32
    %40 = tpu.dynamic_rotate %39 by %c16_i32_14 dim 2 : vector<2x2x128xf32>, i32 -> vector<2x2x128xf32>
    %c1_i32_15 = arith.constant 1 : i32
    %41 = tpu.dynamic_rotate %40 by %c1_i32_15 dim 1 : vector<2x2x128xf32>, i32 -> vector<2x2x128xf32>
    %cst_16 = arith.constant 0.000000e+00 : f32
    %42 = vector.shape_cast %8 : vector<1x2x1xi1> to vector<1x2x1xi1>
    %43 = vector.broadcast %42 : vector<1x2x1xi1> to vector<2x2x128xi1>
    %44 = vector.broadcast %cst_16 : f32 to vector<2x2x128xf32>
    %45 = arith.select %43, %44, %41 : vector<2x2x128xi1>, vector<2x2x128xf32>
    %46 = vector.shape_cast %28 : vector<1x1x128xi1> to vector<1x1x128xi1>
    %47 = vector.broadcast %46 : vector<1x1x128xi1> to vector<2x2x128xi1>
    %48 = arith.select %47, %45, %40 : vector<2x2x128xi1>, vector<2x2x128xf32>
    %c112_i32_17 = arith.constant 112 : i32
    %49 = tpu.dynamic_rotate %39 by %c112_i32_17 dim 2 : vector<2x2x128xf32>, i32 -> vector<2x2x128xf32>
    %c1_i32_18 = arith.constant 1 : i32
    %50 = tpu.dynamic_rotate %49 by %c1_i32_18 dim 1 : vector<2x2x128xf32>, i32 -> vector<2x2x128xf32>
    %cst_19 = arith.constant 0.000000e+00 : f32
    %51 = vector.shape_cast %10 : vector<1x2x1xi1> to vector<1x2x1xi1>
    %52 = vector.broadcast %51 : vector<1x2x1xi1> to vector<2x2x128xi1>
    %53 = vector.broadcast %cst_19 : f32 to vector<2x2x128xf32>
    %54 = arith.select %52, %53, %50 : vector<2x2x128xi1>, vector<2x2x128xf32>
    %55 = vector.shape_cast %30 : vector<1x1x128xi1> to vector<1x1x128xi1>
    %56 = vector.broadcast %55 : vector<1x1x128xi1> to vector<2x2x128xi1>
    %57 = arith.select %56, %54, %49 : vector<2x2x128xi1>, vector<2x2x128xf32>
    %cst_20 = arith.constant 2.000000e+00 : f32
    %58 = vector.broadcast %cst_20 : f32 to vector<2x2x128xf32>
    %59 = arith.mulf %58, %39 : vector<2x2x128xf32>
    %60 = arith.addf %48, %59 : vector<2x2x128xf32>
    %61 = arith.addf %60, %57 : vector<2x2x128xf32>
    %62 = arith.subf %57, %48 : vector<2x2x128xf32>
    %c127_i32 = arith.constant 127 : i32
    %63 = tpu.dynamic_rotate %61 by %c127_i32 dim 2 : vector<2x2x128xf32>, i32 -> vector<2x2x128xf32>
    %cst_21 = arith.constant 0.000000e+00 : f32
    %64 = vector.shape_cast %34 : vector<1x1x128xi1> to vector<1x1x128xi1>
    %65 = vector.broadcast %64 : vector<1x1x128xi1> to vector<2x2x128xi1>
    %66 = vector.broadcast %cst_21 : f32 to vector<2x2x128xf32>
    %67 = arith.select %65, %66, %63 : vector<2x2x128xi1>, vector<2x2x128xf32>
    %c1_i32_22 = arith.constant 1 : i32
    %68 = tpu.dynamic_rotate %61 by %c1_i32_22 dim 2 : vector<2x2x128xf32>, i32 -> vector<2x2x128xf32>
    %cst_23 = arith.constant 0.000000e+00 : f32
    %69 = vector.shape_cast %32 : vector<1x1x128xi1> to vector<1x1x128xi1>
    %70 = vector.broadcast %69 : vector<1x1x128xi1> to vector<2x2x128xi1>
    %71 = vector.broadcast %cst_23 : f32 to vector<2x2x128xf32>
    %72 = arith.select %70, %71, %68 : vector<2x2x128xi1>, vector<2x2x128xf32>
    %73 = arith.subf %67, %72 : vector<2x2x128xf32>
    %c1_i32_24 = arith.constant 1 : i32
    %74 = tpu.dynamic_rotate %62 by %c1_i32_24 dim 2 : vector<2x2x128xf32>, i32 -> vector<2x2x128xf32>
    %cst_25 = arith.constant 0.000000e+00 : f32
    %75 = vector.shape_cast %32 : vector<1x1x128xi1> to vector<1x1x128xi1>
    %76 = vector.broadcast %75 : vector<1x1x128xi1> to vector<2x2x128xi1>
    %77 = vector.broadcast %cst_25 : f32 to vector<2x2x128xf32>
    %78 = arith.select %76, %77, %74 : vector<2x2x128xi1>, vector<2x2x128xf32>
    %cst_26 = arith.constant 2.000000e+00 : f32
    %79 = vector.broadcast %cst_26 : f32 to vector<2x2x128xf32>
    %80 = arith.mulf %79, %62 : vector<2x2x128xf32>
    %81 = arith.addf %78, %80 : vector<2x2x128xf32>
    %c127_i32_27 = arith.constant 127 : i32
    %82 = tpu.dynamic_rotate %62 by %c127_i32_27 dim 2 : vector<2x2x128xf32>, i32 -> vector<2x2x128xf32>
    %cst_28 = arith.constant 0.000000e+00 : f32
    %83 = vector.shape_cast %34 : vector<1x1x128xi1> to vector<1x1x128xi1>
    %84 = vector.broadcast %83 : vector<1x1x128xi1> to vector<2x2x128xi1>
    %85 = vector.broadcast %cst_28 : f32 to vector<2x2x128xf32>
    %86 = arith.select %84, %85, %82 : vector<2x2x128xi1>, vector<2x2x128xf32>
    %87 = arith.addf %81, %86 : vector<2x2x128xf32>
    %88 = arith.mulf %73, %73 : vector<2x2x128xf32>
    %89 = arith.mulf %87, %87 : vector<2x2x128xf32>
    %90 = arith.addf %88, %89 : vector<2x2x128xf32>
    %91 = math.sqrt %90 : vector<2x2x128xf32>
    %c16_i32_29 = arith.constant 16 : i32
    %92 = tpu.dynamic_rotate %4 by %c16_i32_29 dim 2 : vector<2x2x128xf32>, i32 -> vector<2x2x128xf32>
    %c1_i32_30 = arith.constant 1 : i32
    %93 = tpu.dynamic_rotate %92 by %c1_i32_30 dim 1 : vector<2x2x128xf32>, i32 -> vector<2x2x128xf32>
    %cst_31 = arith.constant 0.000000e+00 : f32
    %94 = vector.shape_cast %8 : vector<1x2x1xi1> to vector<1x2x1xi1>
    %95 = vector.broadcast %94 : vector<1x2x1xi1> to vector<2x2x128xi1>
    %96 = vector.broadcast %cst_31 : f32 to vector<2x2x128xf32>
    %97 = arith.select %95, %96, %93 : vector<2x2x128xi1>, vector<2x2x128xf32>
    %98 = vector.shape_cast %28 : vector<1x1x128xi1> to vector<1x1x128xi1>
    %99 = vector.broadcast %98 : vector<1x1x128xi1> to vector<2x2x128xi1>
    %100 = arith.select %99, %97, %92 : vector<2x2x128xi1>, vector<2x2x128xf32>
    %c112_i32_32 = arith.constant 112 : i32
    %101 = tpu.dynamic_rotate %4 by %c112_i32_32 dim 2 : vector<2x2x128xf32>, i32 -> vector<2x2x128xf32>
    %c1_i32_33 = arith.constant 1 : i32
    %102 = tpu.dynamic_rotate %101 by %c1_i32_33 dim 1 : vector<2x2x128xf32>, i32 -> vector<2x2x128xf32>
    %cst_34 = arith.constant 0.000000e+00 : f32
    %103 = vector.shape_cast %10 : vector<1x2x1xi1> to vector<1x2x1xi1>
    %104 = vector.broadcast %103 : vector<1x2x1xi1> to vector<2x2x128xi1>
    %105 = vector.broadcast %cst_34 : f32 to vector<2x2x128xf32>
    %106 = arith.select %104, %105, %102 : vector<2x2x128xi1>, vector<2x2x128xf32>
    %107 = vector.shape_cast %30 : vector<1x1x128xi1> to vector<1x1x128xi1>
    %108 = vector.broadcast %107 : vector<1x1x128xi1> to vector<2x2x128xi1>
    %109 = arith.select %108, %106, %101 : vector<2x2x128xi1>, vector<2x2x128xf32>
    %cst_35 = arith.constant 2.000000e+00 : f32
    %110 = vector.broadcast %cst_35 : f32 to vector<2x2x128xf32>
    %111 = arith.mulf %110, %4 : vector<2x2x128xf32>
    %112 = arith.addf %100, %111 : vector<2x2x128xf32>
    %113 = arith.addf %112, %109 : vector<2x2x128xf32>
    %114 = arith.subf %109, %100 : vector<2x2x128xf32>
    %c127_i32_36 = arith.constant 127 : i32
    %115 = tpu.dynamic_rotate %113 by %c127_i32_36 dim 2 : vector<2x2x128xf32>, i32 -> vector<2x2x128xf32>
    %cst_37 = arith.constant 0.000000e+00 : f32
    %116 = vector.shape_cast %34 : vector<1x1x128xi1> to vector<1x1x128xi1>
    %117 = vector.broadcast %116 : vector<1x1x128xi1> to vector<2x2x128xi1>
    %118 = vector.broadcast %cst_37 : f32 to vector<2x2x128xf32>
    %119 = arith.select %117, %118, %115 : vector<2x2x128xi1>, vector<2x2x128xf32>
    %c1_i32_38 = arith.constant 1 : i32
    %120 = tpu.dynamic_rotate %113 by %c1_i32_38 dim 2 : vector<2x2x128xf32>, i32 -> vector<2x2x128xf32>
    %cst_39 = arith.constant 0.000000e+00 : f32
    %121 = vector.shape_cast %32 : vector<1x1x128xi1> to vector<1x1x128xi1>
    %122 = vector.broadcast %121 : vector<1x1x128xi1> to vector<2x2x128xi1>
    %123 = vector.broadcast %cst_39 : f32 to vector<2x2x128xf32>
    %124 = arith.select %122, %123, %120 : vector<2x2x128xi1>, vector<2x2x128xf32>
    %125 = arith.subf %119, %124 : vector<2x2x128xf32>
    %c1_i32_40 = arith.constant 1 : i32
    %126 = tpu.dynamic_rotate %114 by %c1_i32_40 dim 2 : vector<2x2x128xf32>, i32 -> vector<2x2x128xf32>
    %cst_41 = arith.constant 0.000000e+00 : f32
    %127 = vector.shape_cast %32 : vector<1x1x128xi1> to vector<1x1x128xi1>
    %128 = vector.broadcast %127 : vector<1x1x128xi1> to vector<2x2x128xi1>
    %129 = vector.broadcast %cst_41 : f32 to vector<2x2x128xf32>
    %130 = arith.select %128, %129, %126 : vector<2x2x128xi1>, vector<2x2x128xf32>
    %cst_42 = arith.constant 2.000000e+00 : f32
    %131 = vector.broadcast %cst_42 : f32 to vector<2x2x128xf32>
    %132 = arith.mulf %131, %114 : vector<2x2x128xf32>
    %133 = arith.addf %130, %132 : vector<2x2x128xf32>
    %c127_i32_43 = arith.constant 127 : i32
    %134 = tpu.dynamic_rotate %114 by %c127_i32_43 dim 2 : vector<2x2x128xf32>, i32 -> vector<2x2x128xf32>
    %cst_44 = arith.constant 0.000000e+00 : f32
    %135 = vector.shape_cast %34 : vector<1x1x128xi1> to vector<1x1x128xi1>
    %136 = vector.broadcast %135 : vector<1x1x128xi1> to vector<2x2x128xi1>
    %137 = vector.broadcast %cst_44 : f32 to vector<2x2x128xf32>
    %138 = arith.select %136, %137, %134 : vector<2x2x128xi1>, vector<2x2x128xf32>
    %139 = arith.addf %133, %138 : vector<2x2x128xf32>
    %140 = arith.mulf %125, %125 : vector<2x2x128xf32>
    %141 = arith.mulf %139, %139 : vector<2x2x128xf32>
    %142 = arith.addf %140, %141 : vector<2x2x128xf32>
    %143 = math.sqrt %142 : vector<2x2x128xf32>
    %144 = arith.subf %91, %143 : vector<2x2x128xf32>
    %145 = arith.mulf %144, %144 : vector<2x2x128xf32>
    %146 = math.log %39 : vector<2x2x128xf32>
    %cst_45 = arith.constant -1.000000e+02 : f32
    %147 = vector.broadcast %cst_45 : f32 to vector<2x2x128xf32>
    %148 = arith.maximumf %146, %147 : vector<2x2x128xf32>
    %cst_46 = arith.constant 1.000000e+00 : f32
    %149 = vector.broadcast %cst_46 : f32 to vector<2x2x128xf32>
    %150 = arith.subf %149, %39 : vector<2x2x128xf32>
    %151 = math.log %150 : vector<2x2x128xf32>
    %cst_47 = arith.constant -1.000000e+02 : f32
    %152 = vector.broadcast %cst_47 : f32 to vector<2x2x128xf32>
    %153 = arith.maximumf %151, %152 : vector<2x2x128xf32>
    %154 = arith.mulf %4, %148 : vector<2x2x128xf32>
    %cst_48 = arith.constant 1.000000e+00 : f32
    %155 = vector.broadcast %cst_48 : f32 to vector<2x2x128xf32>
    %156 = arith.subf %155, %4 : vector<2x2x128xf32>
    %157 = arith.mulf %156, %153 : vector<2x2x128xf32>
    %158 = arith.addf %154, %157 : vector<2x2x128xf32>
    %cst_49 = arith.constant 0.000000e+00 : f32
    %159 = vector.broadcast %cst_49 : f32 to vector<2x2x128xf32>
    %160 = arith.subf %159, %158 : vector<2x2x128xf32>
    %cst_50 = arith.constant 2.000000e+00 : f32
    %161 = vector.broadcast %cst_50 : f32 to vector<2x2x128xf32>
    %162 = arith.mulf %161, %145 : vector<2x2x128xf32>
    %163 = arith.addf %160, %162 : vector<2x2x128xf32>
    %c0_51 = arith.constant 0 : index
    %c0_52 = arith.constant 0 : index
    %164 = vector.load %arg5[%c0_51, %c0_52] : memref<8x128xf32, #tpu.memory_space<vmem>>, vector<2x128xf32>
    %cst_53 = arith.constant dense<0.000000e+00> : vector<2x128xf32>
    %165 = vector.multi_reduction <add>, %163, %cst_53 [0] : vector<2x2x128xf32> to vector<2x128xf32>
    %166 = arith.addf %164, %165 : vector<2x128xf32>
    %c0_54 = arith.constant 0 : index
    %c0_55 = arith.constant 0 : index
    %167 = vector.load %arg5[%c0_54, %c0_55] : memref<8x128xf32, #tpu.memory_space<vmem>>, vector<2x128xf32>
    tpu.vector_store %arg5[%c0_54, %c0_55], %166 {strides = array<i32>} : memref<8x128xf32, #tpu.memory_space<vmem>>, vector<2x128xf32>,
    %c0_i32_56 = arith.constant 0 : i32
    %168 = arith.cmpi eq, %arg1, %c0_i32_56 : i32
    %169 = arith.extui %168 : i1 to i32
    %c0_i32_57 = arith.constant 0 : i32
    %170 = arith.cmpi ne, %169, %c0_i32_57 : i32
    scf.if %170 {
      %c0_58 = arith.constant 0 : index
      %c0_59 = arith.constant 0 : index
      %171 = vector.load %arg5[%c0_58, %c0_59] : memref<8x128xf32, #tpu.memory_space<vmem>>, vector<8x128xf32>
      %172 = vector.shape_cast %171 : vector<8x128xf32> to vector<1x8x128xf32>
      %cst_60 = arith.constant dense<0.000000e+00> : vector<1xf32>
      %173 = vector.multi_reduction <add>, %172, %cst_60 [1, 2] : vector<1x8x128xf32> to vector<1xf32>
      %174 = vector.shape_cast %173 : vector<1xf32> to vector<1x1x1xf32>
      %175 = vector.extract %174[0, 0, 0] : f32 from vector<1x1x1xf32>
      %176 = vector.broadcast %175 : f32 to vector<1x1xf32>
      %cst_61 = arith.constant 0.001953125 : f32
      %177 = vector.broadcast %cst_61 : f32 to vector<1x1xf32>
      %178 = arith.mulf %176, %177 : vector<1x1xf32>
      %179 = vector.shape_cast %178 : vector<1x1xf32> to vector<1x1x1xf32>
      %c0_62 = arith.constant 0 : index
      %c0_63 = arith.constant 0 : index
      %c0_64 = arith.constant 0 : index
      %180 = vector.load %arg4[%c0_62, %c0_63, %c0_64] : memref<1x1x1xf32, #tpu.memory_space<vmem>>, vector<1x1x1xf32>
      tpu.vector_store %arg4[%c0_62, %c0_63, %c0_64], %179 {strides = array<i32>} : memref<1x1x1xf32, #tpu.memory_space<vmem>>, vector<1x1x1xf32>,
    } else {
    }
    return
  }
  func.func @transform_0(%arg0: i32, %arg1: i32) -> (i32, i32, i32) {
    %c1_i32 = arith.constant 1 : i32
    %0 = arith.muli %arg0, %c1_i32 : i32
    %1 = arith.addi %0, %arg1 : i32
    %c0_i32 = arith.constant 0 : i32
    %2 = arith.minsi %1, %c0_i32 : i32
    %c0_i32_0 = arith.constant 0 : i32
    %c0_i32_1 = arith.constant 0 : i32
    %c0_i32_2 = arith.constant 0 : i32
    return %2, %c0_i32_0, %c0_i32_1 : i32, i32, i32
  }
  func.func @transform_1(%arg0: i32, %arg1: i32) -> (i32, i32, i32) {
    %c1_i32 = arith.constant 1 : i32
    %0 = arith.muli %arg0, %c1_i32 : i32
    %1 = arith.addi %0, %arg1 : i32
    %c0_i32 = arith.constant 0 : i32
    %2 = arith.minsi %1, %c0_i32 : i32
    %c0_i32_0 = arith.constant 0 : i32
    %c0_i32_1 = arith.constant 0 : i32
    %c0_i32_2 = arith.constant 0 : i32
    return %2, %c0_i32_0, %c0_i32_1 : i32, i32, i32
  }
  func.func @transform_2(%arg0: i32, %arg1: i32) -> (i32, i32, i32) {
    %c0_i32 = arith.constant 0 : i32
    %c0_i32_0 = arith.constant 0 : i32
    %c0_i32_1 = arith.constant 0 : i32
    return %arg0, %c0_i32, %c0_i32_0 : i32, i32, i32
  }
}

</mosaic_0001>

<llo_original>
// kernel: tpu_custom_call.1
$region0: #{tpu_custom_call.1}
  #allocation0 [shape = 'u32[]', space=smem, size = 0x4, offset = 0x4, fixed_abs, tag = 'smem constant byte address 0x4 - core index']
  #allocation1 [shape = 'u32[72,128]{1,0:T(1,128)}', space=vmem, size = 0x9000, scoped, tag = 'internal scratch']
  #allocation2 [shape = 'f32[8,128]{1,0:T(8,128)}', space=vmem, size = 0x1000, scoped, tag = 'scratch operand']
  %s0 = inlined_call_operand.hbm [shape: f32[2,2,128], index: 0, kind: input, shape index: {}]
  %s1 = inlined_call_operand.hbm [shape: f32[2,2,128], index: 1, kind: input, shape index: {}]
  %s2 = inlined_call_operand.hbm [shape: f32[1,1,1], index: 2, kind: output, shape index: {}]
  %s3 = sld [smem:[#allocation0]]
  $region34: #{tpu_custom_call.1} parent=0
    _
  %s5 = ssub.s32 1, %s3
  %s6 = scalar_select 0, %s5, %s3
  $region1: #{tpu_custom_call.1} parent=0
    #allocation3 [shape = 'u8[2048]{0}', space=vmem, size = 0x800, scoped, tag = 'input window, operand 0, single buffered']
    #allocation4 [shape = 's32[1]{0}', space=sflag, size = 0x4, scoped, tag = 'scoped memory for tpu_custom_call.1']
    #allocation5 [shape = 's32[1]{0}', space=sflag, size = 0x4, scoped, tag = 'scoped memory for tpu_custom_call.1']
    #allocation6 [shape = 'u8[2048]{0}', space=vmem, size = 0x800, scoped, tag = 'input window, operand 1, single buffered']
    #allocation7 [shape = 's32[1]{0}', space=sflag, size = 0x4, scoped, tag = 'scoped memory for tpu_custom_call.1']
    #allocation8 [shape = 'u8[512]{0}', space=vmem, size = 0x400, scoped, tag = 'output window, operand 0, single buffered']
    %7 = vsyncpa [#allocation4], 0
    %8 = vsyncpa [#allocation7], 0
    %9 = vsyncpa [#allocation5], 0
    // Predicated region
    $region2: #{tpu_custom_call.1} parent=1 // pred_check
      _
    $region3: #{tpu_custom_call.1} parent=1 // pred_check_branch
      %11 = sbr.rel (0) target = $region5
    $region4: #{tpu_custom_call.1} parent=1 // pred_region
      %s12 = sadd.s32 0, 0
      %p13 = scmp.lt.s32.totalorder %s12, 0
      %s14 = scalar_select %p13, %s12, 0
      %s15 = smul.u32 2, %s14
      %17 = vsyncadd [#allocation4], 0
      %s18 = smul.addr %s15, 2
      %s19 = scalar_lea.hbm %s0, %s18
      %s20 = sshll.u32 %s19, 4
      %s21 = int_to_ptr.hbm [resolvable:$true] %s20
      %s22 = sshll.u32 [#allocation3], 4
      %s23 = int_to_ptr.vmem [resolvable:$true] %s22
      %28 = dma.hbm_to_vmem [thread:$0]  %s21, 64, %s23, [#allocation4], 32, 32, 2
    $region5: #{tpu_custom_call.1} parent=1 // pred_fallthru
      _
    // Predicated region
    $region6: #{tpu_custom_call.1} parent=1 // pred_check
      _
    $region7: #{tpu_custom_call.1} parent=1 // pred_check_branch
      %30 = sbr.rel (0) target = $region9
    $region8: #{tpu_custom_call.1} parent=1 // pred_region
      %s31 = sadd.s32 0, 0
      %p32 = scmp.lt.s32.totalorder %s31, 0
      %s33 = scalar_select %p32, %s31, 0
      %s34 = smul.u32 2, %s33
      %36 = vsyncadd [#allocation7], 0
      %s37 = smul.addr %s34, 2
      %s38 = scalar_lea.hbm %s1, %s37
      %s39 = sshll.u32 %s38, 4
      %s40 = int_to_ptr.hbm [resolvable:$true] %s39
      %s41 = sshll.u32 [#allocation6], 4
      %s42 = int_to_ptr.vmem [resolvable:$true] %s41
      %47 = dma.hbm_to_vmem [thread:$0]  %s40, 64, %s42, [#allocation7], 32, 32, 2
    $region9: #{tpu_custom_call.1} parent=1 // pred_fallthru
      _
    // Predicated region
    $region10: #{tpu_custom_call.1} parent=1 // pred_check
      _
    $region11: #{tpu_custom_call.1} parent=1 // pred_check_branch
      %49 = sbr.rel (0) target = $region13
    $region12: #{tpu_custom_call.1} parent=1 // pred_region
      %51 = dma.done [#allocation4], 64
    $region13: #{tpu_custom_call.1} parent=1 // pred_fallthru
      _
    // Predicated region
    $region14: #{tpu_custom_call.1} parent=1 // pred_check
      _
    $region15: #{tpu_custom_call.1} parent=1 // pred_check_branch
      %53 = sbr.rel (0) target = $region17
    $region16: #{tpu_custom_call.1} parent=1 // pred_region
      %55 = dma.done [#allocation7], 64
    $region17: #{tpu_custom_call.1} parent=1 // pred_fallthru
      _
    %s56 = sadd.s32 0, 0
    %p57 = scmp.lt.s32.totalorder %s56, 0
    %s58 = scalar_select %p57, %s56, 0
    %s59 = smul.u32 2, %s58
    %s60 = sadd.s32 0, 0
    %p61 = scmp.lt.s32.totalorder %s60, 0
    %s62 = scalar_select %p61, %s60, 0
    %s63 = smul.u32 2, %s62
    %p64 = scmp.eq.s32.totalorder 0, 0
    // Predicated region
    $region18: #{tpu_custom_call.1} parent=1 // pred_check
      %p65 = pneg %p64
    $region19: #{tpu_custom_call.1} parent=1 // pred_check_branch
      %67 = sbr.rel (%p65) target = $region21
    $region20: #{tpu_custom_call.1} parent=1 // pred_region
      %68 = vst [vmem:[#allocation2] sm:$0xff] 0.0
    $region21: #{tpu_custom_call.1} parent=1 // pred_fallthru
      _
    %v69 = vld [vmem:[#allocation3] sm:$0x3]
    %v70 = vld [vmem:[#allocation3 + $0x2] sm:$0x3]
    %v71 = vld [vmem:[#allocation6] sm:$0x3]
    %v72 = vld [vmem:[#allocation6 + $0x2] sm:$0x3]
    %v73 = vlaneseq
    %v74 = vshrl.u32 %v73, 7
    %v75 = vlaneseq
    %v76 = vand.u32 %v75, 127
    %vm77 = vcmp.eq.s32.totalorder %v74, 0
    %vm78 = vcmp.eq.s32.totalorder %v74, 1
    %vm79 = vcmp.lt.s32.totalorder %v76, 0
    %v80 = vsub.s32 0, %v76
    %v81 = vsel %vm79, %v80, %v76
    %v82 = vshrl.u32 %v81, 4
    %v83 = vand.u32 %v81, 15
    %v84 = vsub.s32 0, %v83
    %v85 = vsel %vm79, %v84, %v83
    %vm86 = vcmp.ne.s32.totalorder %v85, 0
    %vm87 = vcmp.lt.s32.totalorder %v85, 0
    %vm88 = vmand %vm87, %vm86
    %v89 = vadd.s32 %v85, 16
    %v90 = vsel %vm88, %v89, %v85
    %vm91 = vcmp.lt.s32.totalorder %v76, 16
    %vm92 = vcmp.ge.s32.totalorder %v76, 112
    %vm93 = vcmp.eq.s32.totalorder %v90, 0
    %vm94 = vcmp.eq.s32.totalorder %v90, 15
    %v95 = vxor.u32 %v69, 2147483648
    %v96 = vxor.u32 %v70, 2147483648
    %v97 = vmul.f32 %v95, 1.442695
    %v98 = vpow.pop %v97
    %v99 = vmul.f32 %v96, 1.442695
    %v100 = vpow.pop %v99
    %v101 = vadd.f32 %v98, 1.0
    %v102 = vadd.f32 %v100, 1.0
    %v103 = vrcp.pop %v101
    %v104 = vmul.f32 %v101, %v103
    %v105 = vsub.f32 1.0, %v104
    %v106 = vmul.f32 %v103, %v105
    %v107 = vadd.f32 %v103, %v106
    %vm108 = vweird.f32 %v101
    %vm109 = vweird.f32 %v103
    %vm110 = vmor %vm108, %vm109
    %v111 = vsel %vm110, %v103, %v107
    %v112 = vand.u32 2147483647, %v101
    %vm113 = vcmp.eq.f32.partialorder %v112, 8.507059e+37
    %v114 = vand.u32 %v101, 2147483648
    %v115 = vor.u32 1.1754944e-38, %v114
    %v116 = vsel %vm113, %v115, %v111
    %v117 = vmul.f32 1.0, %v116
    %v118 = vrcp.pop %v102
    %v119 = vmul.f32 %v102, %v118
    %v120 = vsub.f32 1.0, %v119
    %v121 = vmul.f32 %v118, %v120
    %v122 = vadd.f32 %v118, %v121
    %vm123 = vweird.f32 %v102
    %vm124 = vweird.f32 %v118
    %vm125 = vmor %vm123, %vm124
    %v126 = vsel %vm125, %v118, %v122
    %v127 = vand.u32 2147483647, %v102
    %vm128 = vcmp.eq.f32.partialorder %v127, 8.507059e+37
    %v129 = vand.u32 %v102, 2147483648
    %v130 = vor.u32 1.1754944e-38, %v129
    %v131 = vsel %vm128, %v130, %v126
    %v132 = vmul.f32 1.0, %v131
    %133 = vrot.lane.b32.xlu0 %v117, 16
    %v134 = vpop.permute.xlu0 %133
    %135 = vrot.lane.b32.xlu0 %v132, 16
    %v136 = vpop.permute.xlu0 %135
    %vm137 = vcmask 1047554
    %v138 = vrot.slane %v134, 6
    %v139 = vsel %vm137, %v138, %v134
    %v140 = vrot.slane %v136, 6
    %v141 = vsel %vm137, %v140, %v136
    %v142 = vrot.slane %v139, 6
    %v143 = vrot.slane %v141, 6
    %v144 = vsel %vm137, %v142, %v134
    %v145 = vsel %vm137, %v143, %v136
    %v146 = vsel %vm77, 1, 0
    %vm147 = vcmp.eq.s32.totalorder %v146, 1
    %v150 = vrot.slane %v144, 1
    %v151 = vrot.slane %v145, 1
    %v154 = vsel %vm147, 0.0, %v150
    %v155 = vsel %vm147, 0.0, %v151
    %v156 = vsel %vm91, 1, 0
    %vm157 = vcmp.eq.s32.totalorder %v156, 1
    %v158 = vsel %vm157, %v154, %v134
    %v159 = vsel %vm157, %v155, %v136
    %160 = vrot.lane.b32.xlu0 %v117, 112
    %v161 = vpop.permute.xlu0 %160
    %162 = vrot.lane.b32.xlu0 %v132, 112
    %v163 = vpop.permute.xlu0 %162
    %v164 = vrot.slane %v161, 6
    %v165 = vsel %vm137, %v164, %v161
    %v166 = vrot.slane %v163, 6
    %v167 = vsel %vm137, %v166, %v163
    %v168 = vrot.slane %v165, 6
    %v169 = vrot.slane %v167, 6
    %v170 = vsel %vm137, %v168, %v161
    %v171 = vsel %vm137, %v169, %v163
    %v172 = vsel %vm78, 1, 0
    %vm173 = vcmp.eq.s32.totalorder %v172, 1
    %v176 = vrot.slane %v170, 1
    %v177 = vrot.slane %v171, 1
    %v180 = vsel %vm173, 0.0, %v176
    %v181 = vsel %vm173, 0.0, %v177
    %v182 = vsel %vm92, 1, 0
    %vm183 = vcmp.eq.s32.totalorder %v182, 1
    %v184 = vsel %vm183, %v180, %v161
    %v185 = vsel %vm183, %v181, %v163
    %v186 = vmul.f32 %v117, 2.0
    %v187 = vmul.f32 %v132, 2.0
    %v188 = vadd.f32 %v158, %v186
    %v189 = vadd.f32 %v159, %v187
    %v190 = vadd.f32 %v188, %v184
    %v191 = vadd.f32 %v189, %v185
    %v192 = vsub.f32 %v184, %v158
    %v193 = vsub.f32 %v185, %v159
    %194 = vrot.lane.b32.xlu0 %v190, 127
    %v195 = vpop.permute.xlu0 %194
    %196 = vrot.lane.b32.xlu0 %v191, 127
    %v197 = vpop.permute.xlu0 %196
    %v198 = vsel %vm94, 1, 0
    %vm199 = vcmp.eq.s32.totalorder %v198, 1
    %v200 = vsel %vm199, 0.0, %v195
    %v201 = vsel %vm199, 0.0, %v197
    %202 = vrot.lane.b32.xlu0 %v190, 1
    %v203 = vpop.permute.xlu0 %202
    %204 = vrot.lane.b32.xlu0 %v191, 1
    %v205 = vpop.permute.xlu0 %204
    %v206 = vsel %vm93, 1, 0
    %vm207 = vcmp.eq.s32.totalorder %v206, 1
    %v208 = vsel %vm207, 0.0, %v203
    %v209 = vsel %vm207, 0.0, %v205
    %v210 = vsub.f32 %v200, %v208
    %v211 = vsub.f32 %v201, %v209
    %212 = vrot.lane.b32.xlu0 %v192, 1
    %v213 = vpop.permute.xlu0 %212
    %214 = vrot.lane.b32.xlu0 %v193, 1
    %v215 = vpop.permute.xlu0 %214
    %v216 = vsel %vm207, 0.0, %v213
    %v217 = vsel %vm207, 0.0, %v215
    %v218 = vmul.f32 %v192, 2.0
    %v219 = vmul.f32 %v193, 2.0
    %v220 = vadd.f32 %v216, %v218
    %v221 = vadd.f32 %v217, %v219
    %222 = vrot.lane.b32.xlu0 %v192, 127
    %v223 = vpop.permute.xlu0 %222
    %224 = vrot.lane.b32.xlu0 %v193, 127
    %v225 = vpop.permute.xlu0 %224
    %v226 = vsel %vm199, 0.0, %v223
    %v227 = vsel %vm199, 0.0, %v225
    %v228 = vadd.f32 %v220, %v226
    %v229 = vadd.f32 %v221, %v227
    %v230 = vmul.f32 %v210, %v210
    %v231 = vmul.f32 %v211, %v211
    %v232 = vmul.f32 %v228, %v228
    %v233 = vmul.f32 %v229, %v229
    %v234 = vadd.f32 %v230, %v232
    %v235 = vadd.f32 %v231, %v233
    %v236 = vrsqrt.pop %v234
    %v237 = vmul.f32 %v236, %v234
    %v238 = vmul.f32 %v237, %v236
    %v239 = vmul.f32 0.5, %v238
    %v240 = vsub.f32 1.5, %v239
    %v241 = vmul.f32 %v236, %v240
    %v242 = vmul.f32 %v234, %v241
    %vm243 = vcmp.eq.f32.partialorder %v234, inf
    %v244 = vsel %vm243, %v234, %v242
    %vm245 = vcmp.eq.f32.partialorder %v234, 0.0
    %v246 = vand.u32 %v234, 2147483648
    %v247 = vsel %vm245, %v246, %v244
    %v248 = vrsqrt.pop %v235
    %v249 = vmul.f32 %v248, %v235
    %v250 = vmul.f32 %v249, %v248
    %v251 = vmul.f32 0.5, %v250
    %v252 = vsub.f32 1.5, %v251
    %v253 = vmul.f32 %v248, %v252
    %v254 = vmul.f32 %v235, %v253
    %vm255 = vcmp.eq.f32.partialorder %v235, inf
    %v256 = vsel %vm255, %v235, %v254
    %vm257 = vcmp.eq.f32.partialorder %v235, 0.0
    %v258 = vand.u32 %v235, 2147483648
    %v259 = vsel %vm257, %v258, %v256
    %260 = vrot.lane.b32.xlu0 %v71, 16
    %v261 = vpop.permute.xlu0 %260
    %262 = vrot.lane.b32.xlu0 %v72, 16
    %v263 = vpop.permute.xlu0 %262
    %v264 = vrot.slane %v261, 6
    %v265 = vsel %vm137, %v264, %v261
    %v266 = vrot.slane %v263, 6
    %v267 = vsel %vm137, %v266, %v263
    %v268 = vrot.slane %v265, 6
    %v269 = vrot.slane %v267, 6
    %v270 = vsel %vm137, %v268, %v261
    %v271 = vsel %vm137, %v269, %v263
    %v274 = vrot.slane %v270, 1
    %v275 = vrot.slane %v271, 1
    %v278 = vsel %vm147, 0.0, %v274
    %v279 = vsel %vm147, 0.0, %v275
    %v280 = vsel %vm157, %v278, %v261
    %v281 = vsel %vm157, %v279, %v263
    %282 = vrot.lane.b32.xlu0 %v71, 112
    %v283 = vpop.permute.xlu0 %282
    %284 = vrot.lane.b32.xlu0 %v72, 112
    %v285 = vpop.permute.xlu0 %284
    %v286 = vrot.slane %v283, 6
    %v287 = vsel %vm137, %v286, %v283
    %v288 = vrot.slane %v285, 6
    %v289 = vsel %vm137, %v288, %v285
    %v290 = vrot.slane %v287, 6
    %v291 = vrot.slane %v289, 6
    %v292 = vsel %vm137, %v290, %v283
    %v293 = vsel %vm137, %v291, %v285
    %v296 = vrot.slane %v292, 1
    %v297 = vrot.slane %v293, 1
    %v300 = vsel %vm173, 0.0, %v296
    %v301 = vsel %vm173, 0.0, %v297
    %v302 = vsel %vm183, %v300, %v283
    %v303 = vsel %vm183, %v301, %v285
    %v304 = vmul.f32 %v71, 2.0
    %v305 = vmul.f32 %v72, 2.0
    %v306 = vadd.f32 %v280, %v304
    %v307 = vadd.f32 %v281, %v305
    %v308 = vadd.f32 %v306, %v302
    %v309 = vadd.f32 %v307, %v303
    %v310 = vsub.f32 %v302, %v280
    %v311 = vsub.f32 %v303, %v281
    %312 = vrot.lane.b32.xlu0 %v308, 127
    %v313 = vpop.permute.xlu0 %312
    %314 = vrot.lane.b32.xlu0 %v309, 127
    %v315 = vpop.permute.xlu0 %314
    %v316 = vsel %vm199, 0.0, %v313
    %v317 = vsel %vm199, 0.0, %v315
    %318 = vrot.lane.b32.xlu0 %v308, 1
    %v319 = vpop.permute.xlu0 %318
    %320 = vrot.lane.b32.xlu0 %v309, 1
    %v321 = vpop.permute.xlu0 %320
    %v322 = vsel %vm207, 0.0, %v319
    %v323 = vsel %vm207, 0.0, %v321
    %v324 = vsub.f32 %v316, %v322
    %v325 = vsub.f32 %v317, %v323
    %326 = vrot.lane.b32.xlu0 %v310, 1
    %v327 = vpop.permute.xlu0 %326
    %328 = vrot.lane.b32.xlu0 %v311, 1
    %v329 = vpop.permute.xlu0 %328
    %v330 = vsel %vm207, 0.0, %v327
    %v331 = vsel %vm207, 0.0, %v329
    %v332 = vmul.f32 %v310, 2.0
    %v333 = vmul.f32 %v311, 2.0
    %v334 = vadd.f32 %v330, %v332
    %v335 = vadd.f32 %v331, %v333
    %336 = vrot.lane.b32.xlu0 %v310, 127
    %v337 = vpop.permute.xlu0 %336
    %338 = vrot.lane.b32.xlu0 %v311, 127
    %v339 = vpop.permute.xlu0 %338
    %v340 = vsel %vm199, 0.0, %v337
    %v341 = vsel %vm199, 0.0, %v339
    %v342 = vadd.f32 %v334, %v340
    %v343 = vadd.f32 %v335, %v341
    %v344 = vmul.f32 %v324, %v324
    %v345 = vmul.f32 %v325, %v325
    %v346 = vmul.f32 %v342, %v342
    %v347 = vmul.f32 %v343, %v343
    %v348 = vadd.f32 %v344, %v346
    %v349 = vadd.f32 %v345, %v347
    %v350 = vrsqrt.pop %v348
    %v351 = vmul.f32 %v350, %v348
    %v352 = vmul.f32 %v351, %v350
    %v353 = vmul.f32 0.5, %v352
    %v354 = vsub.f32 1.5, %v353
    %v355 = vmul.f32 %v350, %v354
    %v356 = vmul.f32 %v348, %v355
    %vm357 = vcmp.eq.f32.partialorder %v348, inf
    %v358 = vsel %vm357, %v348, %v356
    %vm359 = vcmp.eq.f32.partialorder %v348, 0.0
    %v360 = vand.u32 %v348, 2147483648
    %v361 = vsel %vm359, %v360, %v358
    %v362 = vrsqrt.pop %v349
    %v363 = vmul.f32 %v362, %v349
    %v364 = vmul.f32 %v363, %v362
    %v365 = vmul.f32 0.5, %v364
    %v366 = vsub.f32 1.5, %v365
    %v367 = vmul.f32 %v362, %v366
    %v368 = vmul.f32 %v349, %v367
    %vm369 = vcmp.eq.f32.partialorder %v349, inf
    %v370 = vsel %vm369, %v349, %v368
    %vm371 = vcmp.eq.f32.partialorder %v349, 0.0
    %v372 = vand.u32 %v349, 2147483648
    %v373 = vsel %vm371, %v372, %v370
    %v374 = vsub.f32 %v247, %v361
    %v375 = vsub.f32 %v259, %v373
    %v376 = vmul.f32 %v374, %v374
    %v377 = vmul.f32 %v375, %v375
    %v378 = vlog2.pop %v117
    %v379 = vmul.f32 %v378, 0.6931472
    %v380 = vlog2.pop %v132
    %v381 = vmul.f32 %v380, 0.6931472
    %v382 = vmax.f32 %v379, -100.0
    %v383 = vmax.f32 %v381, -100.0
    %v384 = vsub.f32 1.0, %v117
    %v385 = vsub.f32 1.0, %v132
    %v386 = vlog2.pop %v384
    %v387 = vmul.f32 %v386, 0.6931472
    %v388 = vlog2.pop %v385
    %v389 = vmul.f32 %v388, 0.6931472
    %v390 = vmax.f32 %v387, -100.0
    %v391 = vmax.f32 %v389, -100.0
    %v392 = vmul.f32 %v71, %v382
    %v393 = vmul.f32 %v72, %v383
    %v394 = vsub.f32 1.0, %v71
    %v395 = vsub.f32 1.0, %v72
    %v396 = vmul.f32 %v394, %v390
    %v397 = vmul.f32 %v395, %v391
    %v398 = vadd.f32 %v392, %v396
    %v399 = vadd.f32 %v393, %v397
    %v400 = vsub.f32 0.0, %v398
    %v401 = vsub.f32 0.0, %v399
    %v402 = vmul.f32 %v376, 2.0
    %v403 = vmul.f32 %v377, 2.0
    %v404 = vadd.f32 %v400, %v402
    %v405 = vadd.f32 %v401, %v403
    %v406 = vld [vmem:[#allocation2] sm:$0x3]
    %vm407 = vcmask 1041408
    %v408 = vsel %vm407, %v404, 0.0
    %v409 = vsel %vm407, %v405, 0.0
    %v410 = vadd.f32 %v408, %v409
    %v411 = vadd.f32 %v406, %v410
    %412 = vst [vmem:[#allocation2] sm:$0x3] %v411
    // Predicated region
    $region22: #{tpu_custom_call.1} parent=1 // pred_check
      %p413 = pneg %p64
    $region23: #{tpu_custom_call.1} parent=1 // pred_check_branch
      %415 = sbr.rel (%p413) target = $region25
    $region24: #{tpu_custom_call.1} parent=1 // pred_region
      %v416 = vld [vmem:[#allocation2] sm:$0xff]
      %417 = vadd.xlane.f32.xlu0 %v416
      %v418 = vpop.xlane.xlu0 %417
      %v419 = vrot.slane %v418, 4
      %v420 = vadd.f32 %v418, %v419
      %v421 = vrot.slane %v420, 2
      %v422 = vadd.f32 %v420, %v421
      %v423 = vrot.slane %v422, 1
      %v424 = vadd.f32 %v422, %v423
      %s425 = vtos %v424
      %v426 = vstv %s425
      %v427 = vmul.f32 %v426, 0.001953125
      %vm428 = vcmask 0
      %429 = vst.msk [vmem:[#allocation8] sm:$0x1] %vm428, %v427
    $region25: #{tpu_custom_call.1} parent=1 // pred_fallthru
      _
    // Predicated region
    $region26: #{tpu_custom_call.1} parent=1 // pred_check
      _
    $region27: #{tpu_custom_call.1} parent=1 // pred_check_branch
      %431 = sbr.rel (0) target = $region29
    $region28: #{tpu_custom_call.1} parent=1 // pred_region
      %433 = vsyncadd [#allocation5], 0
      %s435 = sshll.u32 [#allocation8], 4
      %s436 = int_to_ptr.vmem [resolvable:$true] %s435
      %s437 = sshll.u32 %s2, 4
      %s438 = int_to_ptr.hbm [resolvable:$true] %s437
      %440 = dma.vmem_to_hbm [thread:$0]  %s436, 16, %s438, [#allocation5]
    $region29: #{tpu_custom_call.1} parent=1 // pred_fallthru
      _
    // Predicated region
    $region30: #{tpu_custom_call.1} parent=1 // pred_check
      _
    $region31: #{tpu_custom_call.1} parent=1 // pred_check_branch
      %442 = sbr.rel (0) target = $region33
    $region32: #{tpu_custom_call.1} parent=1 // pred_region
      %444 = dma.done [#allocation5], 16
    $region33: #{tpu_custom_call.1} parent=1 // pred_fallthru
      _
    %445 = vsyncpa [#allocation4], 1
    %446 = vsyncpa [#allocation7], 1
    %447 = vsyncpa [#allocation5], 1

</llo_original>
